<compile_context>
chip_gen: v7x
topology: tpu7x:2x2x1
jax: 0.10.0
libtpu: 0.0.40
codegen_flags: <defaults>
</compile_context>

<pallas_src>
import jax
import jax.numpy as jnp
import numpy as np
from jax import lax
from jax.experimental import pallas as pl
from jax.experimental.pallas import tpu as pltpu


def _round_up(x, m):
    return (x + m - 1) // m * m


def _vmem_capacity_bytes():
    try:
        return int(pltpu.get_tpu_info().vmem_capacity_bytes)
    except Exception:
        return 64 << 20          # conservative fallback (v7x physical VMEM)


def _pick_row_tile(OH, N, cost_fn, budget):
    """Largest divisor of OH whose per-step VMEM cost fits `budget`, preferring
    tilings that give the grid >= 2 parallel blocks (v7x has 2 TensorCores)."""
    divisors = [t for t in range(OH, 0, -1) if OH % t == 0]
    fitting = [t for t in divisors if cost_fn(t) <= budget]
    if not fitting:
        return 1
    for t in fitting:                      # cost is monotone: big tiles first
        if N * (OH // t) >= 2:
            return t
    return fitting[0]                      # N==1 and OH==1: single block unavoidable


def _make_kernel(*, KH, KW, WP, L, act, compute_dtype):
    def kernel(xw_ref, w_ref, b_ref, o_ref):
        # Window already in compute_dtype (host-side cast); astype is a no-op then.
        xf = xw_ref[...].astype(compute_dtype)
        # Fold KH*KW into the contraction dim: stack the shifted taps along sublanes
        # (VMEM-only) and issue a single GEMM with K = KH*KW*cin_p.
        taps = [xf[:, kh * WP + kw: kh * WP + kw + L]
                for kh in range(KH) for kw in range(KW)]
        xs = taps[0] if len(taps) == 1 else jnp.concatenate(taps, axis=0)
        y = jnp.dot(w_ref[...], xs, preferred_element_type=jnp.float32)
        y = y + b_ref[...]                         # folded-BN bias, f32 epilogue
        if act == "relu":
            y = jnp.maximum(y, 0.0)
        elif act == "hard_swish":
            y = y * jnp.clip(y + 3.0, 0.0, 6.0) * (1.0 / 6.0)
        o_ref[...] = y.astype(o_ref.dtype)         # lane-dense full-width slab store
    return kernel


def conv_bn_act(x, weight, gamma, beta, running_mean, running_var, *,
                stride=1, padding=0, groups=1, act=None, eps=1e-5,
                compute_dtype=jnp.float32, max_row_tile=None):
    """Conv2d(bias=False) + BatchNorm2d (inference stats) + optional ReLU/HSwish."""
    N, Cin, H, W = x.shape
    Cout, Cin_g, KH, KW = weight.shape
    assert Cin == Cin_g * groups and Cout % groups == 0
    assert act in (None, "relu", "hard_swish")
    Cout_g = Cout // groups

    # Fold BatchNorm (inference): scale into weights, only the bias survives.
    scale = gamma / jnp.sqrt(running_var + eps)
    bias = beta - running_mean * scale
    w_fold = weight * scale[:, None, None, None]

    HP, WP = H + 2 * padding, W + 2 * padding
    OH = (HP - KH) // stride + 1
    OW = (WP - KW) // stride + 1
    cin_p = _round_up(Cin_g, 8)                    # sublane-align the GEMM K dim
    Kdim = KH * KW * cin_p

    # Generation-aware VMEM budgets (v7x: 64 MiB physical; v5e/v6e: 128 MiB).
    vmem_cap = _vmem_capacity_bytes()
    if vmem_cap <= (64 << 20):
        vmem_limit, budget = 48 << 20, 16 << 20
    else:
        vmem_limit, budget = 64 << 20, 32 << 20

    cdt_sz = jnp.dtype(compute_dtype).itemsize
    out_sz = jnp.dtype(x.dtype).itemsize

    def vmem_cost(t):
        in_h = (t - 1) * stride + KH
        win = in_h * WP + (KW - 1)
        l = ((t - 1) * stride + 1) * WP
        c = 2 * cin_p * win * cdt_sz               # double-buffered input block
        c += 2 * Cout_g * l * out_sz               # double-buffered output block
        c += 2 * Cout_g * Kdim * cdt_sz            # resident weights
        c += cin_p * win * cdt_sz                  # loaded window temp
        c += Kdim * l * cdt_sz                     # stacked taps temp
        c += 2 * Cout_g * l * 4                    # f32 accumulator + epilogue temp
        return c

    TOH = _pick_row_tile(OH, N, vmem_cost, budget)
    if max_row_tile is not None:                   # tuning / testing override
        TOH = max(t for t in range(1, min(TOH, max_row_tile) + 1) if OH % t == 0)
    n_tiles = OH // TOH
    IN_H = (TOH - 1) * stride + KH                 # input rows per window (with halo)
    TOH_f = (TOH - 1) * stride + 1                 # full-res output rows per window
    WIN = IN_H * WP + (KW - 1)                     # flat window + tail pad for kw taps
    L = TOH_f * WP                                 # output slab lanes per step

    kernel = _make_kernel(KH=KH, KW=KW, WP=WP, L=L, act=act,
                          compute_dtype=compute_dtype)

    outs = []
    # TODO(synk): add a group grid axis (and a VPU depthwise path for groups == Cin)
    #             instead of one pallas_call per group; the example uses groups == 1.
    for g in range(groups):
        xg = x[:, g * Cin_g:(g + 1) * Cin_g]
        # Spatial zero-pad + host-side channel pad to cin_p (no per-step zeroing).
        xp = jnp.pad(xg, ((0, 0), (0, cin_p - Cin_g),
                          (padding, padding), (padding, padding)))
        if n_tiles == 1:
            xw = xp[:, :, :IN_H, :].reshape(N, 1, cin_p, IN_H * WP)
        else:
            starts = np.arange(n_tiles) * (TOH * stride)
            ridx = starts[:, None] + np.arange(IN_H)[None, :]     # (n_tiles, IN_H)
            xw = xp[:, :, ridx, :]                                # halo-duplicated rows
            xw = jnp.transpose(xw, (0, 2, 1, 3, 4)).reshape(
                N, n_tiles, cin_p, IN_H * WP)
        if KW > 1:
            xw = jnp.pad(xw, ((0, 0), (0, 0), (0, 0), (0, KW - 1)))
        xw = xw.astype(compute_dtype)              # single cast, halves DMA for bf16

        wg = w_fold[g * Cout_g:(g + 1) * Cout_g]                  # (Cout_g,Cin_g,KH,KW)
        w2 = jnp.transpose(wg, (0, 2, 3, 1))                      # (Cout_g,KH,KW,Cin_g)
        if cin_p != Cin_g:
            w2 = jnp.pad(w2, ((0, 0), (0, 0), (0, 0), (0, cin_p - Cin_g)))
        w2 = w2.reshape(Cout_g, Kdim).astype(compute_dtype)
        bg = bias[g * Cout_g:(g + 1) * Cout_g].reshape(Cout_g, 1).astype(jnp.float32)

        flops = int(2 * N * n_tiles * Cout_g * L * Kdim)
        bytes_accessed = int(xw.size * cdt_sz + w2.size * cdt_sz + bg.size * 4
                             + N * n_tiles * Cout_g * L * out_sz)

        y = pl.pallas_call(
            kernel,
            out_shape=jax.ShapeDtypeStruct((N, n_tiles, Cout_g, L), x.dtype),
            grid=(N, n_tiles),
            in_specs=[
                # Auto-pipelined (double-buffered) window block — no manual DMA.
                pl.BlockSpec((None, None, cin_p, WIN), lambda n, t: (n, t, 0, 0)),
                pl.BlockSpec((Cout_g, Kdim), lambda n, t: (0, 0)),
                pl.BlockSpec((Cout_g, 1), lambda n, t: (0, 0)),
            ],
            out_specs=pl.BlockSpec((None, None, Cout_g, L), lambda n, t: (n, t, 0, 0)),
            compiler_params=pltpu.CompilerParams(
                dimension_semantics=("parallel", "parallel"),
                vmem_limit_bytes=vmem_limit),
            cost_estimate=pl.CostEstimate(flops=flops, transcendentals=0,
                                          bytes_accessed=bytes_accessed),
        )(xw, w2, bg)

        # Epilogue in the wrapper: crop the OW valid columns and (for stride > 1)
        # subsample the full-resolution rows/cols.
        # TODO(synk): dedicated strided fast path — stride>1 currently computes the
        #             full-res conv over the window (~stride^2 extra MXU work).
        y = y.reshape(N, n_tiles, Cout_g, TOH_f, WP)
        y = y[:, :, :, ::stride, 0:(OW - 1) * stride + 1:stride]
        y = jnp.transpose(y, (0, 2, 1, 3, 4)).reshape(N, Cout_g, OH, OW)
        outs.append(y)

    return outs[0] if groups == 1 else jnp.concatenate(outs, axis=1)


def _reference(x, weight, gamma, beta, rmean, rvar, *, stride, padding, groups, act,
               eps=1e-5):
    y = lax.conv_general_dilated(
        x, weight, window_strides=(stride, stride),
        padding=[(padding, padding), (padding, padding)],
        dimension_numbers=("NCHW", "OIHW", "NCHW"),
        feature_group_count=groups)
    scale = gamma / jnp.sqrt(rvar + eps)
    bias = beta - rmean * scale
    y = y * scale[None, :, None, None] + bias[None, :, None, None]
    if act == "relu":
        y = jnp.maximum(y, 0.0)
    elif act == "hard_swish":
        y = y * jnp.clip(y + 3.0, 0.0, 6.0) / 6.0
    return y


if __name__ == "__main__":
    # ConvBNACT(in_channels=4, out_channels=8, kernel_size=3, stride=1, padding=1,
    #           groups=1, act='hard_swish')   — TODO(synk): training-mode BN (batch
    # statistics) not implemented; inference running stats are used.
    in_channels, out_channels, ksz = 4, 8, 3
    N, H, W = 2, 16, 16

    key = jax.random.PRNGKey(0)
    kx, kwk, kg, kb, km, kv = jax.random.split(key, 6)
    x = jax.random.normal(kx, (N, in_channels, H, W), dtype=jnp.float32)
    weight = jax.random.normal(kwk, (out_channels, in_channels, ksz, ksz),
                               dtype=jnp.float32) * 0.2
    gamma = 1.0 + 0.1 * jax.random.normal(kg, (out_channels,), dtype=jnp.float32)
    beta = 0.1 * jax.random.normal(kb, (out_channels,), dtype=jnp.float32)
    rmean = 0.1 * jax.random.normal(km, (out_channels,), dtype=jnp.float32)
    rvar = 1.0 + 0.1 * jax.random.uniform(kv, (out_channels,), dtype=jnp.float32)

    # 1) Main config (f32 compute).
    out = conv_bn_act(x, weight, gamma, beta, rmean, rvar,
                      stride=1, padding=1, groups=1, act="hard_swish")
    out = jax.block_until_ready(out)
    ref = _reference(x, weight, gamma, beta, rmean, rvar,
                     stride=1, padding=1, groups=1, act="hard_swish")
    np.testing.assert_allclose(np.asarray(out), np.asarray(ref), atol=2e-3, rtol=2e-3)

    # 2) bf16 MXU path (the perf default on v6e/v7x when tolerance allows).
    out_bf = conv_bn_act(x, weight, gamma, beta, rmean, rvar,
                         stride=1, padding=1, groups=1, act="hard_swish",
                         compute_dtype=jnp.bfloat16)
    out_bf = jax.block_until_ready(out_bf)
    np.testing.assert_allclose(np.asarray(out_bf), np.asarray(ref),
                               atol=1e-1, rtol=1e-1)

    # 3) Row-tiled path (halo-duplicated windows, multiple blocks per image).
    out_t = conv_bn_act(x, weight, gamma, beta, rmean, rvar,
                        stride=1, padding=1, groups=1, act="hard_swish",
                        max_row_tile=4)
    out_t = jax.block_until_ready(out_t)
    np.testing.assert_allclose(np.asarray(out_t), np.asarray(ref), atol=2e-3, rtol=2e-3)

    # 4) stride-2 + ReLU (downsampling ConvBNACT in DBNet backbones).
    out_s2 = conv_bn_act(x, weight, gamma, beta, rmean, rvar,
                         stride=2, padding=1, groups=1, act="relu")
    out_s2 = jax.block_until_ready(out_s2)
    ref_s2 = _reference(x, weight, gamma, beta, rmean, rvar,
                        stride=2, padding=1, groups=1, act="relu")
    np.testing.assert_allclose(np.asarray(out_s2), np.asarray(ref_s2),
                               atol=2e-3, rtol=2e-3)

    # 5) 1x1 conv, no activation.
    w11 = weight[:, :, :1, :1]
    out_11 = conv_bn_act(x, w11, gamma, beta, rmean, rvar,
                         stride=1, padding=0, groups=1, act=None)
    out_11 = jax.block_until_ready(out_11)
    ref_11 = _reference(x, w11, gamma, beta, rmean, rvar,
                        stride=1, padding=0, groups=1, act=None)
    np.testing.assert_allclose(np.asarray(out_11), np.asarray(ref_11),
                               atol=2e-3, rtol=2e-3)

    print("KERNEL_OK")
</pallas_src>

<mosaic_0001>
module attributes {stable_mosaic.version = 11 : i64} {
  func.func @kernel(%arg0: i32, %arg1: i32, %arg2: memref<1x1x8x326xf32, #tpu.memory_space<vmem>>, %arg3: memref<8x72xf32, #tpu.memory_space<vmem>>, %arg4: memref<8x1xf32, #tpu.memory_space<vmem>>, %arg5: memref<1x1x8x288xf32, #tpu.memory_space<vmem>>) attributes {dimension_semantics = [#tpu.dimension_semantics<parallel>, #tpu.dimension_semantics<parallel>], iteration_bounds = array<i64: 2, 1>, scalar_prefetch = 0 : i64, scratch_operands = 0 : i64, tpu.core_type = #tpu.core_type<tc>, window_params = [{transform_indices = @transform_0, window_bounds = array<i64: 1, 1, 8, 326>}, {pipeline_mode = #tpu.pipeline_mode<synchronous>, transform_indices = @transform_1, window_bounds = array<i64: 8, 72>}, {pipeline_mode = #tpu.pipeline_mode<synchronous>, transform_indices = @transform_2, window_bounds = array<i64: 8, 1>}, {transform_indices = @transform_3, window_bounds = array<i64: 1, 1, 8, 288>}]} {
    %c0 = arith.constant 0 : index
    %c0_0 = arith.constant 0 : index
    %c0_1 = arith.constant 0 : index
    %c0_2 = arith.constant 0 : index
    %0 = vector.load %arg2[%c0, %c0_0, %c0_1, %c0_2] : memref<1x1x8x326xf32, #tpu.memory_space<vmem>>, vector<1x1x8x326xf32>
    %1 = vector.shape_cast %0 : vector<1x1x8x326xf32> to vector<8x326xf32>
    %2 = vector.extract_strided_slice %1 {offsets = [0, 0], sizes = [8, 288], strides = [1, 1]} : vector<8x326xf32> to vector<8x288xf32>
    %3 = vector.extract_strided_slice %1 {offsets = [0, 1], sizes = [8, 288], strides = [1, 1]} : vector<8x326xf32> to vector<8x288xf32>
    %4 = vector.extract_strided_slice %1 {offsets = [0, 2], sizes = [8, 288], strides = [1, 1]} : vector<8x326xf32> to vector<8x288xf32>
    %5 = vector.extract_strided_slice %1 {offsets = [0, 18], sizes = [8, 288], strides = [1, 1]} : vector<8x326xf32> to vector<8x288xf32>
    %6 = vector.extract_strided_slice %1 {offsets = [0, 19], sizes = [8, 288], strides = [1, 1]} : vector<8x326xf32> to vector<8x288xf32>
    %7 = vector.extract_strided_slice %1 {offsets = [0, 20], sizes = [8, 288], strides = [1, 1]} : vector<8x326xf32> to vector<8x288xf32>
    %8 = vector.extract_strided_slice %1 {offsets = [0, 36], sizes = [8, 288], strides = [1, 1]} : vector<8x326xf32> to vector<8x288xf32>
    %9 = vector.extract_strided_slice %1 {offsets = [0, 37], sizes = [8, 288], strides = [1, 1]} : vector<8x326xf32> to vector<8x288xf32>
    %10 = vector.extract_strided_slice %1 {offsets = [0, 38], sizes = [8, 288], strides = [1, 1]} : vector<8x326xf32> to vector<8x288xf32>
    %11 = tpu.concatenate %2, %3, %4, %5, %6, %7, %8, %9, %10 in 0 : vector<8x288xf32>, vector<8x288xf32>, vector<8x288xf32>, vector<8x288xf32>, vector<8x288xf32>, vector<8x288xf32>, vector<8x288xf32>, vector<8x288xf32>, vector<8x288xf32> -> vector<72x288xf32>
    %c0_3 = arith.constant 0 : index
    %c0_4 = arith.constant 0 : index
    %12 = vector.load %arg3[%c0_3, %c0_4] : memref<8x72xf32, #tpu.memory_space<vmem>>, vector<8x72xf32>
    %cst = arith.constant dense<0.000000e+00> : vector<8x288xf32>
    %13 = tpu.matmul %12, %11, %cst {dimension_numbers = #tpu.dot_dimension_numbers<[1], [0], [0], [1], [0, 0, 1, 1], [], []>} : vector<8x72xf32>, vector<72x288xf32>, vector<8x288xf32> -> vector<8x288xf32>
    %c0_5 = arith.constant 0 : index
    %c0_6 = arith.constant 0 : index
    %14 = vector.load %arg4[%c0_5, %c0_6] : memref<8x1xf32, #tpu.memory_space<vmem>>, vector<8x1xf32>
    %15 = vector.broadcast %14 : vector<8x1xf32> to vector<8x288xf32>
    %16 = arith.addf %13, %15 : vector<8x288xf32>
    %cst_7 = arith.constant 3.000000e+00 : f32
    %17 = vector.broadcast %cst_7 : f32 to vector<8x288xf32>
    %18 = arith.addf %16, %17 : vector<8x288xf32>
    %cst_8 = arith.constant 0.000000e+00 : f32
    %cst_9 = arith.constant 6.000000e+00 : f32
    %19 = vector.broadcast %cst_8 : f32 to vector<8x288xf32>
    %20 = arith.maximumf %19, %18 : vector<8x288xf32>
    %21 = vector.broadcast %cst_9 : f32 to vector<8x288xf32>
    %22 = arith.minimumf %21, %20 : vector<8x288xf32>
    %23 = arith.mulf %16, %22 : vector<8x288xf32>
    %cst_10 = arith.constant 0.166666672 : f32
    %24 = vector.broadcast %cst_10 : f32 to vector<8x288xf32>
    %25 = arith.mulf %23, %24 : vector<8x288xf32>
    %c0_11 = arith.constant 0 : index
    %c0_12 = arith.constant 0 : index
    %c0_13 = arith.constant 0 : index
    %c0_14 = arith.constant 0 : index
    %26 = vector.load %arg5[%c0_11, %c0_12, %c0_13, %c0_14] : memref<1x1x8x288xf32, #tpu.memory_space<vmem>>, vector<1x1x8x288xf32>
    %27 = vector.shape_cast %26 : vector<1x1x8x288xf32> to vector<8x288xf32>
    %28 = vector.shape_cast %25 : vector<8x288xf32> to vector<1x1x8x288xf32>
    tpu.vector_store %arg5[%c0_11, %c0_12, %c0_13, %c0_14], %28 {strides = array<i32>} : memref<1x1x8x288xf32, #tpu.memory_space<vmem>>, vector<1x1x8x288xf32>,
    return
  }
  func.func @transform_0(%arg0: i32, %arg1: i32) -> (i32, i32, i32, i32) {
    %c0_i32 = arith.constant 0 : i32
    %c0_i32_0 = arith.constant 0 : i32
    %c0_i32_1 = arith.constant 0 : i32
    return %arg0, %arg1, %c0_i32, %c0_i32_0 : i32, i32, i32, i32
  }
  func.func @transform_1(%arg0: i32, %arg1: i32) -> (i32, i32) {
    %c0_i32 = arith.constant 0 : i32
    %c0_i32_0 = arith.constant 0 : i32
    %c0_i32_1 = arith.constant 0 : i32
    return %c0_i32, %c0_i32_0 : i32, i32
  }
  func.func @transform_2(%arg0: i32, %arg1: i32) -> (i32, i32) {
    %c0_i32 = arith.constant 0 : i32
    %c0_i32_0 = arith.constant 0 : i32
    %c0_i32_1 = arith.constant 0 : i32
    return %c0_i32, %c0_i32_0 : i32, i32
  }
  func.func @transform_3(%arg0: i32, %arg1: i32) -> (i32, i32, i32, i32) {
    %c0_i32 = arith.constant 0 : i32
    %c0_i32_0 = arith.constant 0 : i32
    %c0_i32_1 = arith.constant 0 : i32
    return %arg0, %arg1, %c0_i32, %c0_i32_0 : i32, i32, i32, i32
  }
}

</mosaic_0001>

<llo_original>
// kernel: tpu_custom_call.1
$region0: #{tpu_custom_call.1}
  #allocation0 [shape = 'u32[]', space=smem, size = 0x4, offset = 0x4, fixed_abs, tag = 'smem constant byte address 0x4 - core index']
  #allocation1 [shape = 'u32[144,128]{1,0:T(1,128)}', space=vmem, size = 0x12000, scoped, tag = 'internal scratch']
  %s0 = inlined_call_operand.hbm [shape: f32[2,1,8,326], index: 0, kind: input, shape index: {}]
  %s1 = inlined_call_operand.vmem [shape: f32[8,72], index: 1, kind: input, shape index: {}]
  %s2 = inlined_call_operand.vmem [shape: f32[8,1], index: 2, kind: input, shape index: {}]
  %s3 = inlined_call_operand.hbm [shape: f32[2,1,8,288], index: 3, kind: output, shape index: {}]
  %s4 = sld [smem:[#allocation0]]
  $region49: #{tpu_custom_call.1} parent=0
    _
  %s6 = ssub.s32 1, %s4
  %s7 = scalar_select 0, %s6, %s4
  $region1: #{tpu_custom_call.1} parent=0
    #allocation2 [shape = 'u8[24576]{0}', space=vmem, size = 0x6000, scoped, tag = 'input window, operand 0']
    #allocation3 [shape = 's32[2]{0}', space=sflag, size = 0x8, scoped, tag = 'scoped memory for tpu_custom_call.1']
    #allocation4 [shape = 's32[2]{0}', space=sflag, size = 0x8, scoped, tag = 'scoped memory for tpu_custom_call.1']
    #allocation5 [shape = 'u8[24576]{0}', space=vmem, size = 0x6000, scoped, tag = 'output window, operand 0']
    %8 = vsyncpa [#allocation3], 0
    %s9 = scalar_lea.sflag [#allocation3], 1
    %10 = vsyncpa %s9, 0
    %11 = vsyncpa [#allocation4], 0
    %s12 = scalar_lea.sflag [#allocation4], 1
    %13 = vsyncpa %s12, 0
    loop: start=0, step=1, limit=4
    $region2: #{tpu_custom_call.1} parent=1 // loop_pre_header
      _
    $region3: #{tpu_custom_call.1} parent=1 // loop_header
      %s15 = sphi 0, %s19
      %p16 = scmp.ge.s32.totalorder %s15, 4
      %s22 = sphi 0, %s34
      %s23 = sphi 0, %s30
      %s24 = sphi 0, %s22
      %s25 = sphi 0, %s23
      %s26 = sphi 0, %s24
      %s27 = sphi 0, %s25
      %s39 = sphi 0, %s41
      %s42 = sphi 0, %s39
      %s43 = sphi 0, %s42
      %s59 = sphi 0, %s43
      %s63 = sphi 0, %s63
      %s65 = sphi 0, %s63
      %s66 = sphi 0, %s65
      %s80 = sphi 0, %s66
      %s84 = sphi 0, %s84
      %s86 = sphi 0, %s84
      %s87 = sphi 0, %s86
      %s101 = sphi 0, %s87
      %s109 = sphi 0, %s111
      %s112 = sphi 0, %s109
      %s113 = sphi 0, %s112
      %s129 = sphi 0, %s113
    $region4: #{tpu_custom_call.1} parent=1 // loop_header_branch
      %18 = sbr.rel (%p16) target = $region8
    $region5: #{tpu_custom_call.1} parent=1 // loop_body
      %s20 = ssub.s32 %s15, 1
      %s21 = ssub.s32 %s15, 2
      %s28 = sadd.s32 1, %s23
      %p29 = scmp.ge.s32.totalorder %s28, 1
      %s30 = scalar_select %p29, 0, %s28
      %s31 = sadd.s32 1, %s22
      %s32 = scalar_select %p29, %s31, %s22
      %p33 = scmp.ge.s32.totalorder %s32, 2
      %s34 = scalar_select %p33, 0, %s32
      %s35 = ssub.s32 %s22, %s34
      %s36 = ssub.s32 %s23, %s30
      %s37 = sor.u32 %s35, %s36
      %p38 = scmp.eq.s32.totalorder %s37, 0
      %s40 = sadd.s32 %s39, 1
      %s41 = scalar_select %p38, %s39, %s40
      %p44 = pneg %p38
      %p45 = scmp.eq.s32.totalorder %s15, 1
      %p46 = por %p44, %p45
      %p47 = scmp.ne.s32.totalorder %s39, %s42
      %p48 = scmp.eq.s32.totalorder %s15, 0
      %p49 = por %p47, %p48
      %p50 = scmp.ne.s32.totalorder %s39, %s42
      %p51 = scmp.eq.s32.totalorder %s20, 1
      %p52 = por %p50, %p51
      %p53 = scmp.ne.s32.totalorder %s42, %s43
      %p54 = scmp.eq.s32.totalorder %s20, 0
      %p55 = por %p53, %p54
      %p56 = scmp.ne.s32.totalorder %s42, %s43
      %p57 = scmp.eq.s32.totalorder %s21, 1
      %p58 = por %p56, %p57
      %p60 = scmp.ne.s32.totalorder %s43, %s59
      %p61 = scmp.eq.s32.totalorder %s21, 0
      %p62 = por %p60, %p61
      %s64 = sadd.s32 %s63, 1
      %p67 = scmp.eq.s32.totalorder %s15, 1
      %p68 = scmp.ne.s32.totalorder %s63, %s65
      %p69 = scmp.eq.s32.totalorder %s15, 0
      %p70 = por %p68, %p69
      %p71 = scmp.ne.s32.totalorder %s63, %s65
      %p72 = scmp.eq.s32.totalorder %s20, 1
      %p73 = por %p71, %p72
      %p74 = scmp.ne.s32.totalorder %s65, %s66
      %p75 = scmp.eq.s32.totalorder %s20, 0
      %p76 = por %p74, %p75
      %p77 = scmp.ne.s32.totalorder %s65, %s66
      %p78 = scmp.eq.s32.totalorder %s21, 1
      %p79 = por %p77, %p78
      %p81 = scmp.ne.s32.totalorder %s66, %s80
      %p82 = scmp.eq.s32.totalorder %s21, 0
      %p83 = por %p81, %p82
      %s85 = sadd.s32 %s84, 1
      %p88 = scmp.eq.s32.totalorder %s15, 1
      %p89 = scmp.ne.s32.totalorder %s84, %s86
      %p90 = scmp.eq.s32.totalorder %s15, 0
      %p91 = por %p89, %p90
      %p92 = scmp.ne.s32.totalorder %s84, %s86
      %p93 = scmp.eq.s32.totalorder %s20, 1
      %p94 = por %p92, %p93
      %p95 = scmp.ne.s32.totalorder %s86, %s87
      %p96 = scmp.eq.s32.totalorder %s20, 0
      %p97 = por %p95, %p96
      %p98 = scmp.ne.s32.totalorder %s86, %s87
      %p99 = scmp.eq.s32.totalorder %s21, 1
      %p100 = por %p98, %p99
      %p102 = scmp.ne.s32.totalorder %s87, %s101
      %p103 = scmp.eq.s32.totalorder %s21, 0
      %p104 = por %p102, %p103
      %s105 = ssub.s32 %s22, %s34
      %s106 = ssub.s32 %s23, %s30
      %s107 = sor.u32 %s105, %s106
      %p108 = scmp.eq.s32.totalorder %s107, 0
      %s110 = sadd.s32 %s109, 1
      %s111 = scalar_select %p108, %s109, %s110
      %p114 = pneg %p108
      %p115 = scmp.eq.s32.totalorder %s15, 1
      %p116 = por %p114, %p115
      %p117 = scmp.ne.s32.totalorder %s109, %s112
      %p118 = scmp.eq.s32.totalorder %s15, 0
      %p119 = por %p117, %p118
      %p120 = scmp.ne.s32.totalorder %s109, %s112
      %p121 = scmp.eq.s32.totalorder %s20, 1
      %p122 = por %p120, %p121
      %p123 = scmp.ne.s32.totalorder %s112, %s113
      %p124 = scmp.eq.s32.totalorder %s20, 0
      %p125 = por %p123, %p124
      %p126 = scmp.ne.s32.totalorder %s112, %s113
      %p127 = scmp.eq.s32.totalorder %s21, 1
      %p128 = por %p126, %p127
      %p130 = scmp.ne.s32.totalorder %s113, %s129
      %p131 = scmp.eq.s32.totalorder %s21, 0
      %p132 = por %p130, %p131
      %p133 = scmp.le.s32.totalorder 1, %s15
      %p134 = scmp.lt.s32.totalorder %s15, 3
      %p135 = pnand %p133, %p134
      %p136 = pneg %p135
      // Predicated region
      $region9: #{tpu_custom_call.1} parent=5 // pred_check
        _
      $region10: #{tpu_custom_call.1} parent=5 // pred_check_branch
        %138 = sbr.rel (%p135) target = $region12
      $region11: #{tpu_custom_call.1} parent=5 // pred_region
        %s139 = ssub.s32 %s15, 1
        // Predicated region
        $region13: #{tpu_custom_call.1} parent=11 // pred_check
          %p140 = pneg %p76
        $region14: #{tpu_custom_call.1} parent=11 // pred_check_branch
          %142 = sbr.rel (%p140) target = $region16
        $region15: #{tpu_custom_call.1} parent=11 // pred_region
          _
        $region16: #{tpu_custom_call.1} parent=11 // pred_fallthru
          _
        // Predicated region
        $region17: #{tpu_custom_call.1} parent=11 // pred_check
          %p143 = pneg %p97
        $region18: #{tpu_custom_call.1} parent=11 // pred_check_branch
          %145 = sbr.rel (%p143) target = $region20
        $region19: #{tpu_custom_call.1} parent=11 // pred_region
          _
        $region20: #{tpu_custom_call.1} parent=11 // pred_fallthru
          _
      $region12: #{tpu_custom_call.1} parent=5 // pred_fallthru
        _
      %p146 = scmp.lt.s32.totalorder %s15, 2
      // Predicated region
      $region21: #{tpu_custom_call.1} parent=5 // pred_check
        %p147 = pneg %p146
      $region22: #{tpu_custom_call.1} parent=5 // pred_check_branch
        %149 = sbr.rel (%p147) target = $region24
      $region23: #{tpu_custom_call.1} parent=5 // pred_region
        // Predicated region
        $region25: #{tpu_custom_call.1} parent=23 // pred_check
          %p150 = pneg %p49
        $region26: #{tpu_custom_call.1} parent=23 // pred_check_branch
          %152 = sbr.rel (%p150) target = $region28
        $region27: #{tpu_custom_call.1} parent=23 // pred_region
          %s153 = sand.u32 %s39, 1
          %s154 = scalar_lea.sflag [#allocation3], %s153
          %s155 = sand.u32 %s39, 1
          %s156 = smul.addr %s155, 24
          %s157 = scalar_lea.vmem [#allocation2], %s156
          %s159 = ssub.s32 384, 384
          %160 = vsyncadd %s154, %s159
          %s161 = smul.addr %s23, 3
          %s162 = smul.addr %s22, 3
          %s163 = sadd.s32 %s161, %s162
          %s164 = smul.addr %s163, 128
          %s165 = scalar_lea.hbm %s0, %s164
          %s167 = sshll.u32 %s157, 4
          %s168 = int_to_ptr.vmem [resolvable:$true] %s167
          %170 = dma.hbm_to_vmem [thread:$0]  %s165, 384, %s168, %s154
        $region28: #{tpu_custom_call.1} parent=23 // pred_fallthru
          _
      $region24: #{tpu_custom_call.1} parent=5 // pred_fallthru
        _
      %p171 = scmp.le.s32.totalorder 1, %s15
      %p172 = scmp.lt.s32.totalorder %s15, 3
      %p173 = pnand %p171, %p172
      %p174 = pneg %p173
      // Predicated region
      $region29: #{tpu_custom_call.1} parent=5 // pred_check
        _
      $region30: #{tpu_custom_call.1} parent=5 // pred_check_branch
        %176 = sbr.rel (%p173) target = $region32
      $region31: #{tpu_custom_call.1} parent=5 // pred_region
        %s177 = ssub.s32 %s15, 1
        %s178 = sand.u32 %s42, 1
        %s179 = scalar_lea.sflag [#allocation3], %s178
        %s180 = sand.u32 %s42, 1
        %s181 = smul.addr %s180, 24
        %s182 = scalar_lea.vmem [#allocation2], %s181
        // Predicated region
        $region33: #{tpu_custom_call.1} parent=31 // pred_check
          %p183 = pneg %p55
        $region34: #{tpu_custom_call.1} parent=31 // pred_check_branch
          %185 = sbr.rel (%p183) target = $region36
        $region35: #{tpu_custom_call.1} parent=31 // pred_region
          %186 = dma.done %s179, 384
        $region36: #{tpu_custom_call.1} parent=31 // pred_fallthru
          _
        %s187 = sand.u32 %s42, 1
        %s188 = scalar_lea.sflag [#allocation3], %s187
        %s189 = sand.u32 %s42, 1
        %s190 = smul.addr %s189, 24
        %s191 = scalar_lea.vmem [#allocation2], %s190
        %p192 = pneg %p55
        %p193 = pneg %p52
        %p194 = pneg %p76
        %p195 = pneg %p73
        %p196 = pneg %p97
        %p197 = pneg %p94
        %p198 = pneg %p125
        %p199 = pneg %p122
        %s200 = sand.u32 %s112, 1
        %s201 = scalar_lea.sflag [#allocation4], %s200
        %s202 = sand.u32 %s112, 1
        %s203 = smul.addr %s202, 24
        %s204 = scalar_lea.vmem [#allocation5], %s203
        %v205 = vld [vmem:[%s182] sm:$0xff]
        %v206 = vld [vmem:[%s182 + $0x8] sm:$0xff]
        %v207 = vld [vmem:[%s182 + $0x10] sm:$0xff]
        %211 = vrot.lane.b32.xlu0 %v205, 127
        %v212 = vpop.permute.xlu0 %211
        %213 = vrot.lane.b32.xlu0 %v206, 127
        %v214 = vpop.permute.xlu0 %213
        %215 = vrot.lane.b32.xlu0 %v207, 127
        %v216 = vpop.permute.xlu0 %215
        %vm217 = vcmask 1039360
        %v218 = vsel %vm217, %v212, %v214
        %v219 = vsel %vm217, %v214, %v216
        %223 = vrot.lane.b32.xlu0 %v205, 126
        %v224 = vpop.permute.xlu0 %223
        %225 = vrot.lane.b32.xlu0 %v206, 126
        %v226 = vpop.permute.xlu0 %225
        %227 = vrot.lane.b32.xlu0 %v207, 126
        %v228 = vpop.permute.xlu0 %227
        %vm229 = vcmask 1031168
        %v230 = vsel %vm229, %v224, %v226
        %v231 = vsel %vm229, %v226, %v228
        %235 = vrot.lane.b32.xlu0 %v205, 110
        %v236 = vpop.permute.xlu0 %235
        %237 = vrot.lane.b32.xlu0 %v206, 110
        %v238 = vpop.permute.xlu0 %237
        %239 = vrot.lane.b32.xlu0 %v207, 110
        %v240 = vpop.permute.xlu0 %239
        %vm241 = vcmask 900096
        %v242 = vsel %vm241, %v236, %v238
        %v243 = vsel %vm241, %v238, %v240
        %247 = vrot.lane.b32.xlu0 %v205, 109
        %v248 = vpop.permute.xlu0 %247
        %249 = vrot.lane.b32.xlu0 %v206, 109
        %v250 = vpop.permute.xlu0 %249
        %251 = vrot.lane.b32.xlu0 %v207, 109
        %v252 = vpop.permute.xlu0 %251
        %vm253 = vcmask 891904
        %v254 = vsel %vm253, %v248, %v250
        %v255 = vsel %vm253, %v250, %v252
        %259 = vrot.lane.b32.xlu0 %v205, 108
        %v260 = vpop.permute.xlu0 %259
        %261 = vrot.lane.b32.xlu0 %v206, 108
        %v262 = vpop.permute.xlu0 %261
        %263 = vrot.lane.b32.xlu0 %v207, 108
        %v264 = vpop.permute.xlu0 %263
        %vm265 = vcmask 883712
        %v266 = vsel %vm265, %v260, %v262
        %v267 = vsel %vm265, %v262, %v264
        %271 = vrot.lane.b32.xlu0 %v205, 92
        %v272 = vpop.permute.xlu0 %271
        %273 = vrot.lane.b32.xlu0 %v206, 92
        %v274 = vpop.permute.xlu0 %273
        %275 = vrot.lane.b32.xlu0 %v207, 92
        %v276 = vpop.permute.xlu0 %275
        %vm277 = vcmask 752640
        %v278 = vsel %vm277, %v272, %v274
        %v279 = vsel %vm277, %v274, %v276
        %283 = vrot.lane.b32.xlu0 %v205, 91
        %v284 = vpop.permute.xlu0 %283
        %285 = vrot.lane.b32.xlu0 %v206, 91
        %v286 = vpop.permute.xlu0 %285
        %287 = vrot.lane.b32.xlu0 %v207, 91
        %v288 = vpop.permute.xlu0 %287
        %vm289 = vcmask 744448
        %v290 = vsel %vm289, %v284, %v286
        %v291 = vsel %vm289, %v286, %v288
        %295 = vrot.lane.b32.xlu0 %v205, 90
        %v296 = vpop.permute.xlu0 %295
        %297 = vrot.lane.b32.xlu0 %v206, 90
        %v298 = vpop.permute.xlu0 %297
        %299 = vrot.lane.b32.xlu0 %v207, 90
        %v300 = vpop.permute.xlu0 %299
        %vm301 = vcmask 736256
        %v302 = vsel %vm301, %v296, %v298
        %v303 = vsel %vm301, %v298, %v300
        %v307 = vld [vmem:[%s1] sm:$0xff]
        %v308 = vld [vmem:[%s2] sm:$0xff]
        %310 = vset.pattern.permute.xlu0 0
        %311 = vperm.xlu0 %310, %v308
        %v312 = vpop.permute.xlu0 %311
        %vm314 = vcmask 588800
        %v316 = vsel %vm314, %v307, 0
        %318 = vmatprep.subr.mxu0 %v206
        %319 = vmatpush1.msra.mxu0 %v205
        %320 = vmatprep.subr.mxu0 %v219
        %321 = vmatpush1.msra.mxu0 %v218
        %322 = vmatprep.subr.mxu0 %v231
        %323 = vmatpush1.msra.mxu0 %v230
        %324 = vmatprep.subr.mxu0 %v243
        %325 = vmatpush1.msra.mxu0 %v242
        %326 = vmatprep.subr.mxu0 %v255
        %327 = vmatpush1.msra.mxu0 %v254
        %328 = vmatprep.subr.mxu0 %v267
        %329 = vmatpush1.msra.mxu0 %v266
        %330 = vmatprep.subr.mxu0 %v279
        %331 = vmatpush1.msra.mxu0 %v278
        %332 = vmatprep.subr.mxu0 %v291
        %333 = vmatpush1.msra.mxu0 %v290
        %334 = vmatprep.subr.mxu0 %v303
        %335 = vmatpush1.msra.mxu0 %v302
        %336 = vmatprep.subr.mxu0 0.0
        %337 = vmatpush1.msra.mxu0 0.0
        %338 = vmatprep.subr.mxu0 0.0
        %339 = vmatpush1.msra.mxu0 0.0
        %340 = vmatprep.subr.mxu0 0.0
        %341 = vmatpush1.msra.mxu0 0.0
        %342 = vmatprep.subr.mxu0 0.0
        %343 = vmatpush1.msra.mxu0 0.0
        %344 = vmatprep.subr.mxu0 0.0
        %345 = vmatpush1.msra.mxu0 0.0
        %346 = vmatprep.subr.mxu0 0.0
        %347 = vmatpush1.msra.mxu0 0.0
        %348 = vmatprep.subr.mxu0 0.0
        %349 = vmatpush1.msra.mxu0 0.0
        %350 = vmatprep.subr.mxu0 0.0
        %351 = vmatpush1.msra.mxu0 0.0
        %352 = vmatprep.subr.mxu0 0.0
        %353 = vmatpush1.msra.mxu0 0.0
        %354 = vmatprep.subr.mxu0 0.0
        %355 = vmatpush1.msra.mxu0 0.0
        %356 = vmatprep.subr.mxu0 0.0
        %357 = vmatpush1.msra.mxu0 0.0
        %358 = vmatprep.subr.mxu0 0.0
        %359 = vmatpush1.msra.mxu0 0.0
        %360 = vmatprep.subr.mxu0 0.0
        %361 = vmatpush1.msra.mxu0 0.0
        %362 = vmatprep.subr.mxu0 0.0
        %363 = vmatpush1.msra.mxu0 0.0
        %364 = vmatprep.subr.mxu0 0.0
        %365 = vmatpush1.msra.mxu0 0.0
        %366 = vmatprep.subr.mxu0 0.0
        %367 = vmatpush1.msra.mxu0 0.0
        %368 = vmatprep.subr.mxu0 0.0
        %369 = vmatpush1.msra.mxu0 0.0
        %370 = vmatprep.subr.mxu0 0.0
        %371 = vmatpush1.msra.mxu0 0.0
        %372 = vmatprep.subr.mxu0 0.0
        %373 = vmatpush1.msra.mxu0 0.0
        %374 = vmatprep.subr.mxu0 0.0
        %375 = vmatpush1.msra.mxu0 0.0
        %376 = vmatprep.subr.mxu0 0.0
        %377 = vmatpush1.msra.mxu0 0.0
        %378 = vmatprep.subr.mxu0 0.0
        %379 = vmatpush1.msra.mxu0 0.0
        %380 = vmatprep.subr.mxu0 0.0
        %381 = vmatpush1.msra.mxu0 0.0
        %382 = vmatprep.mubr.f32.mxu0 0.0
        %383 = vmatmul.mubr.f32.gmra.mrb[0].mxu0 %v316
        %v384 = vpop.f32.mrb[0].mxu0
        %v385 = vadd.f32 %v312, %v384
        %v386 = vpop.f32.mrb[0].mxu0
        %v387 = vadd.f32 %v312, %v386
        %388 = vdwg.mxu0
        %389 = vmatprep.subr.mxu0 0.0
        %390 = vmatpush1.msra.mxu0 %v207
        %391 = vmatprep.subr.mxu0 0.0
        %392 = vmatpush1.msra.mxu0 %v216
        %393 = vmatprep.subr.mxu0 0.0
        %394 = vmatpush1.msra.mxu0 %v228
        %395 = vmatprep.subr.mxu0 0.0
        %396 = vmatpush1.msra.mxu0 %v240
        %397 = vmatprep.subr.mxu0 0.0
        %398 = vmatpush1.msra.mxu0 %v252
        %399 = vmatprep.subr.mxu0 0.0
        %400 = vmatpush1.msra.mxu0 %v264
        %401 = vmatprep.subr.mxu0 0.0
        %402 = vmatpush1.msra.mxu0 %v276
        %403 = vmatprep.subr.mxu0 0.0
        %404 = vmatpush1.msra.mxu0 %v288
        %405 = vmatprep.subr.mxu0 0.0
        %406 = vmatpush1.msra.mxu0 %v300
        %407 = vmatprep.subr.mxu0 0.0
        %408 = vmatpush1.msra.mxu0 0.0
        %409 = vmatprep.subr.mxu0 0.0
        %410 = vmatpush1.msra.mxu0 0.0
        %411 = vmatprep.subr.mxu0 0.0
        %412 = vmatpush1.msra.mxu0 0.0
        %413 = vmatprep.subr.mxu0 0.0
        %414 = vmatpush1.msra.mxu0 0.0
        %415 = vmatprep.subr.mxu0 0.0
        %416 = vmatpush1.msra.mxu0 0.0
        %417 = vmatprep.subr.mxu0 0.0
        %418 = vmatpush1.msra.mxu0 0.0
        %419 = vmatprep.subr.mxu0 0.0
        %420 = vmatpush1.msra.mxu0 0.0
        %421 = vmatprep.subr.mxu0 0.0
        %422 = vmatpush1.msra.mxu0 0.0
        %423 = vmatprep.subr.mxu0 0.0
        %424 = vmatpush1.msra.mxu0 0.0
        %425 = vmatprep.subr.mxu0 0.0
        %426 = vmatpush1.msra.mxu0 0.0
        %427 = vmatprep.subr.mxu0 0.0
        %428 = vmatpush1.msra.mxu0 0.0
        %429 = vmatprep.subr.mxu0 0.0
        %430 = vmatpush1.msra.mxu0 0.0
        %431 = vmatprep.subr.mxu0 0.0
        %432 = vmatpush1.msra.mxu0 0.0
        %433 = vmatprep.subr.mxu0 0.0
        %434 = vmatpush1.msra.mxu0 0.0
        %435 = vmatprep.subr.mxu0 0.0
        %436 = vmatpush1.msra.mxu0 0.0
        %437 = vmatprep.subr.mxu0 0.0
        %438 = vmatpush1.msra.mxu0 0.0
        %439 = vmatprep.subr.mxu0 0.0
        %440 = vmatpush1.msra.mxu0 0.0
        %441 = vmatprep.subr.mxu0 0.0
        %442 = vmatpush1.msra.mxu0 0.0
        %443 = vmatprep.subr.mxu0 0.0
        %444 = vmatpush1.msra.mxu0 0.0
        %445 = vmatprep.subr.mxu0 0.0
        %446 = vmatpush1.msra.mxu0 0.0
        %447 = vmatprep.subr.mxu0 0.0
        %448 = vmatpush1.msra.mxu0 0.0
        %449 = vmatprep.subr.mxu0 0.0
        %450 = vmatpush1.msra.mxu0 0.0
        %451 = vmatprep.subr.mxu0 0.0
        %452 = vmatpush1.msra.mxu0 0.0
        %453 = vmatprep.mubr.f32.mxu0 0.0
        %454 = vmatmul.mubr.f32.gmra.mrb[0].mxu0 %v316
        %v455 = vpop.f32.mrb[0].mxu0
        %v456 = vadd.f32 %v312, %v455
        %v457 = vpop.f32.mrb[0].mxu0
        %458 = vdwg.mxu0
        %v459 = vadd.f32 %v385, 3.0
        %v460 = vadd.f32 %v387, 3.0
        %v461 = vadd.f32 %v456, 3.0
        %v462 = vmax.f32 %v459, 0.0
        %v463 = vmax.f32 %v460, 0.0
        %v464 = vmax.f32 %v461, 0.0
        %v465 = vmin.f32 %v462, 6.0
        %v466 = vmin.f32 %v463, 6.0
        %v467 = vmin.f32 %v464, 6.0
        %v468 = vmul.f32 %v385, %v465
        %v469 = vmul.f32 %v387, %v466
        %v470 = vmul.f32 %v456, %v467
        %v471 = vmul.f32 %v468, 0.16666667
        %v472 = vmul.f32 %v469, 0.16666667
        %v473 = vmul.f32 %v470, 0.16666667
        %474 = vst [vmem:[%s204] sm:$0xff] %v471
        %475 = vst [vmem:[%s204 + $0x8] sm:$0xff] %v472
        %vm476 = vcmask 261120
        %477 = vst.msk [vmem:[%s204 + $0x10] sm:$0xff] %vm476, %v473
        %s478 = sand.u32 %s112, 1
        %s479 = scalar_lea.sflag [#allocation4], %s478
        %s480 = sand.u32 %s112, 1
        %s481 = smul.addr %s480, 24
        %s482 = scalar_lea.vmem [#allocation5], %s481
        // Predicated region
        $region37: #{tpu_custom_call.1} parent=31 // pred_check
          %p483 = pneg %p122
        $region38: #{tpu_custom_call.1} parent=31 // pred_check_branch
          %485 = sbr.rel (%p483) target = $region40
        $region39: #{tpu_custom_call.1} parent=31 // pred_region
          %s487 = ssub.s32 384, 384
          %488 = vsyncadd %s479, %s487
          %s489 = smul.addr %s25, 3
          %s490 = smul.addr %s24, 3
          %s491 = sadd.s32 %s489, %s490
          %s492 = smul.addr %s491, 128
          %s493 = scalar_lea.hbm %s3, %s492
          %s495 = sshll.u32 %s482, 4
          %s496 = int_to_ptr.vmem [resolvable:$true] %s495
          %498 = dma.vmem_to_hbm [thread:$0]  %s496, 384, %s493, %s479
        $region40: #{tpu_custom_call.1} parent=31 // pred_fallthru
          _
      $region32: #{tpu_custom_call.1} parent=5 // pred_fallthru
        _
      %p499 = scmp.le.s32.totalorder 2, %s15
      // Predicated region
      $region41: #{tpu_custom_call.1} parent=5 // pred_check
        %p500 = pneg %p499
      $region42: #{tpu_custom_call.1} parent=5 // pred_check_branch
        %502 = sbr.rel (%p500) target = $region44
      $region43: #{tpu_custom_call.1} parent=5 // pred_region
        %s503 = ssub.s32 %s15, 2
        // Predicated region
        $region45: #{tpu_custom_call.1} parent=43 // pred_check
          %p504 = pneg %p128
        $region46: #{tpu_custom_call.1} parent=43 // pred_check_branch
          %506 = sbr.rel (%p504) target = $region48
        $region47: #{tpu_custom_call.1} parent=43 // pred_region
          %s507 = sand.u32 %s113, 1
          %s508 = scalar_lea.sflag [#allocation4], %s507
          %s509 = sand.u32 %s113, 1
          %s510 = smul.addr %s509, 24
          %s511 = scalar_lea.vmem [#allocation5], %s510
          %512 = dma.done %s508, 384
        $region48: #{tpu_custom_call.1} parent=43 // pred_fallthru
          _
      $region44: #{tpu_custom_call.1} parent=5 // pred_fallthru
        _
    $region6: #{tpu_custom_call.1} parent=1 // loop_footer
      %s19 = sadd.s32 1, %s15
    $region7: #{tpu_custom_call.1} parent=1 // loop_footer_branch
      %14 = sbr.rel target = $region3
    $region8: #{tpu_custom_call.1} parent=1 // loop_exit
      _
    %513 = vsyncpa [#allocation3], 1
    %s514 = scalar_lea.sflag [#allocation3], 1
    %515 = vsyncpa %s514, 1
    %516 = vsyncpa [#allocation4], 1
    %s517 = scalar_lea.sflag [#allocation4], 1
    %518 = vsyncpa %s517, 1

</llo_original>
